<compile_context>
chip_gen: v5e
topology: v5e:2x2
jax: 0.10.0
libtpu: 0.0.40
codegen_flags: <defaults>
</compile_context>

<pallas_src>
import jax
import jax.numpy as jnp
from jax import lax
from jax.experimental import pallas as pl
from jax.experimental.pallas import tpu as pltpu

H = 32   # hidden_size
V = 16   # output_size (vocab)
L = 10   # max_length
BW = max(L, H, V)   # lane width of the packed misc-bias slab


def attn_decoder_kernel(
    tokens_ref,    # SMEM (T,) int32 : token index per decode step
    emb_ref,       # (V, H)          : embedding table
    h0_ref,        # (1, H)          : initial hidden state
    enc_ref,       # (L, H)          : encoder outputs
    w_attn_ref,    # (2H, L)         : attn Linear weight, rows [emb ; hidden]
    w_comb_ref,    # (2H, H)         : attn_combine weight, rows [emb ; attn_applied]
    w_ih_ref,      # (H, 3H)         : GRU input weights, columns [r z n]
    w_hh_ref,      # (H, 3H)         : GRU hidden weights, columns [r z n]
    w_out_ref,     # (H, V)          : output Linear weight
    b_gru_ref,     # (2, 3H)         : row0 = b_ih, row1 = b_hh
    b_misc_ref,    # (3, BW)         : row0[:L]=b_attn, row1[:H]=b_comb, row2[:V]=b_out
    logp_ref,      # out (T, V)      : log-softmax outputs per step
    hfin_ref,      # out (1, H)      : final hidden state
    attnw_ref,     # out (T, L)      : attention weights per step
):
    T = logp_ref.shape[0]

    def step(t, h):
        # --- embedding lookup (dropout = eval-mode identity); clamp against OOB ---
        tok = jnp.clip(tokens_ref[t], 0, V - 1)
        emb = emb_ref[pl.ds(tok, 1), :]                              # (1, H)

        # --- attn_weights = softmax(Linear_2H->L(cat(emb, h))) ---
        # concat folded into a split matmul: cat(e,h) @ W == e @ W[:H] + h @ W[H:]
        attn_logits = (
            jnp.dot(emb, w_attn_ref[0:H, :], preferred_element_type=jnp.float32)
            + jnp.dot(h, w_attn_ref[H:2 * H, :], preferred_element_type=jnp.float32)
            + b_misc_ref[0:1, 0:L]
        )                                                            # (1, L)
        m = jnp.max(attn_logits, axis=1, keepdims=True)
        ex = jnp.exp(attn_logits - m)
        attn_w = ex * pl.reciprocal(jnp.sum(ex, axis=1, keepdims=True), approx=True)
        attnw_ref[pl.ds(t, 1), :] = attn_w

        # --- attn_applied = attn_w @ encoder_outputs : (1,L)@(L,H)->(1,H) ---
        attn_applied = jnp.dot(attn_w, enc_ref[...],
                               preferred_element_type=jnp.float32)

        # --- x = relu(Linear_2H->H(cat(emb, attn_applied))) ---
        x = jnp.maximum(
            jnp.dot(emb, w_comb_ref[0:H, :], preferred_element_type=jnp.float32)
            + jnp.dot(attn_applied, w_comb_ref[H:2 * H, :],
                      preferred_element_type=jnp.float32)
            + b_misc_ref[1:2, 0:H],
            0.0,
        )                                                            # (1, H)

        # --- single-step GRU cell, fused gate matmuls (PyTorch r,z,n order) ---
        gi = (jnp.dot(x, w_ih_ref[...], preferred_element_type=jnp.float32)
              + b_gru_ref[0:1, :])                                   # (1, 3H)
        gh = (jnp.dot(h, w_hh_ref[...], preferred_element_type=jnp.float32)
              + b_gru_ref[1:2, :])                                   # (1, 3H)
        r = jax.nn.sigmoid(gi[:, 0:H] + gh[:, 0:H])
        z = jax.nn.sigmoid(gi[:, H:2 * H] + gh[:, H:2 * H])
        n = jnp.tanh(gi[:, 2 * H:3 * H] + r * gh[:, 2 * H:3 * H])
        h_new = (1.0 - z) * n + z * h                                # (1, H)

        # --- log_softmax(Linear_H->V(h_new)) ---
        logits = (jnp.dot(h_new, w_out_ref[...], preferred_element_type=jnp.float32)
                  + b_misc_ref[2:3, 0:V])                            # (1, V)
        lm = jnp.max(logits, axis=1, keepdims=True)
        sh = logits - lm
        lse = jnp.log(jnp.sum(jnp.exp(sh), axis=1, keepdims=True))
        logp_ref[pl.ds(t, 1), :] = sh - lse

        return h_new

    h_final = lax.fori_loop(0, T, step, h0_ref[...], unroll=True)
    hfin_ref[...] = h_final


# ----------------------------------------------------------------------------
# parameter handling
# ----------------------------------------------------------------------------
def make_params(key):
    """Deterministic parameter init mimicking PyTorch default shapes."""
    ks = jax.random.split(key, 12)

    def uni(k, shape, fan_in):
        bound = 1.0 / jnp.sqrt(jnp.float32(fan_in))
        return jax.random.uniform(k, shape, jnp.float32, -bound, bound)

    return {
        "embedding_weight": jax.random.normal(ks[0], (V, H), jnp.float32),   # nn.Embedding
        "attn_weight": uni(ks[1], (L, 2 * H), 2 * H),                        # nn.Linear(2H, L)
        "attn_bias": uni(ks[2], (L,), 2 * H),
        "attn_combine_weight": uni(ks[3], (H, 2 * H), 2 * H),                # nn.Linear(2H, H)
        "attn_combine_bias": uni(ks[4], (H,), 2 * H),
        "gru_weight_ih": uni(ks[5], (3 * H, H), H),                          # nn.GRU
        "gru_weight_hh": uni(ks[6], (3 * H, H), H),
        "gru_bias_ih": uni(ks[7], (3 * H,), H),
        "gru_bias_hh": uni(ks[8], (3 * H,), H),
        "out_weight": uni(ks[9], (V, H), H),                                 # nn.Linear(H, V)
        "out_bias": uni(ks[10], (V,), H),
    }


def prepare_params(params):
    """One-time transposes / packing of PyTorch-layout params into kernel layout."""
    b_misc = jnp.zeros((3, BW), jnp.float32)
    b_misc = b_misc.at[0, :L].set(params["attn_bias"])
    b_misc = b_misc.at[1, :H].set(params["attn_combine_bias"])
    b_misc = b_misc.at[2, :V].set(params["out_bias"])
    return {
        "emb": params["embedding_weight"].astype(jnp.float32),          # (V, H)
        "w_attn": params["attn_weight"].T.astype(jnp.float32),          # (2H, L)
        "w_comb": params["attn_combine_weight"].T.astype(jnp.float32),  # (2H, H)
        "w_ih": params["gru_weight_ih"].T.astype(jnp.float32),          # (H, 3H)
        "w_hh": params["gru_weight_hh"].T.astype(jnp.float32),          # (H, 3H)
        "w_out": params["out_weight"].T.astype(jnp.float32),            # (H, V)
        "b_gru": jnp.stack(
            [params["gru_bias_ih"], params["gru_bias_hh"]], axis=0
        ).astype(jnp.float32),                                          # (2, 3H)
        "b_misc": b_misc,                                               # (3, BW)
    }


# ----------------------------------------------------------------------------
# wrappers
# ----------------------------------------------------------------------------
def attn_decoder_decode(tokens, hidden, encoder_outputs, kparams):
    """Run T teacher-forced decode steps inside ONE pallas_call.

    tokens: (T,) int32; hidden: (1,1,H); encoder_outputs: (L,H).
    Returns (log_probs (T,V), final hidden (1,1,H), attn_weights (T,L)).
    """
    tokens = jnp.asarray(tokens, jnp.int32).reshape(-1)
    T = tokens.shape[0]
    h0 = hidden.reshape(1, H).astype(jnp.float32)
    enc = encoder_outputs.astype(jnp.float32)

    vmem = pl.BlockSpec(memory_space=pltpu.MemorySpace.VMEM)
    smem = pl.BlockSpec(memory_space=pltpu.MemorySpace.SMEM)

    logp, h_fin, attn_w = pl.pallas_call(
        attn_decoder_kernel,
        out_shape=(
            jax.ShapeDtypeStruct((T, V), jnp.float32),
            jax.ShapeDtypeStruct((1, H), jnp.float32),
            jax.ShapeDtypeStruct((T, L), jnp.float32),
        ),
        in_specs=[smem] + [vmem] * 10,
        out_specs=(vmem, vmem, vmem),
    )(
        tokens,
        kparams["emb"],
        h0,
        enc,
        kparams["w_attn"],
        kparams["w_comb"],
        kparams["w_ih"],
        kparams["w_hh"],
        kparams["w_out"],
        kparams["b_gru"],
        kparams["b_misc"],
    )
    return logp, h_fin.reshape(1, 1, H), attn_w


def attn_decoder_forward(token_idx, hidden, encoder_outputs, kparams):
    """Single-step forward matching the PyTorch module signature/shapes."""
    tokens = jnp.asarray(token_idx, jnp.int32).reshape(1)
    logp, h_new, attn_w = attn_decoder_decode(tokens, hidden, encoder_outputs, kparams)
    # output (1, V), hidden (1, 1, H), attn_weights (1, L)
    return logp, h_new, attn_w


# ----------------------------------------------------------------------------
# pure-JAX reference (mirrors the PyTorch forward, eval mode)
# ----------------------------------------------------------------------------
def reference_forward(token_idx, hidden, encoder_outputs, params):
    emb = params["embedding_weight"][token_idx].reshape(1, H)
    h = hidden.reshape(1, H)
    cat1 = jnp.concatenate([emb, h], axis=1)
    attn_logits = cat1 @ params["attn_weight"].T + params["attn_bias"]
    attn_w = jax.nn.softmax(attn_logits, axis=1)
    attn_applied = attn_w @ encoder_outputs                       # (1, H)
    cat2 = jnp.concatenate([emb, attn_applied], axis=1)
    x = jax.nn.relu(cat2 @ params["attn_combine_weight"].T + params["attn_combine_bias"])
    wih, whh = params["gru_weight_ih"], params["gru_weight_hh"]
    bih, bhh = params["gru_bias_ih"], params["gru_bias_hh"]
    gi = x @ wih.T + bih
    gh = h @ whh.T + bhh
    r = jax.nn.sigmoid(gi[:, 0:H] + gh[:, 0:H])
    z = jax.nn.sigmoid(gi[:, H:2 * H] + gh[:, H:2 * H])
    n = jnp.tanh(gi[:, 2 * H:] + r * gh[:, 2 * H:])
    h_new = (1.0 - z) * n + z * h
    logits = h_new @ params["out_weight"].T + params["out_bias"]
    logp = jax.nn.log_softmax(logits, axis=1)
    return logp, h_new.reshape(1, 1, H), attn_w


if __name__ == "__main__":
    key = jax.random.PRNGKey(0)
    kp, kh, ke, kt = jax.random.split(key, 4)

    params = make_params(kp)
    kparams = prepare_params(params)          # one-time layout prep (hoisted out of the step)

    hidden = jax.random.normal(kh, (1, 1, H), jnp.float32)       # previous hidden state
    encoder_outputs = jax.random.normal(ke, (L, H), jnp.float32)

    # tolerance 2e-3: approx reciprocal (EUP) in the softmax denominator.
    ATOL = RTOL = 2e-3

    # --- single-step forward (module semantics) ---
    token_idx = jnp.int32(3)
    out = attn_decoder_forward(token_idx, hidden, encoder_outputs, kparams)
    out = jax.block_until_ready(out)
    ref = reference_forward(token_idx, hidden, encoder_outputs, params)
    for got, want in zip(out, ref):
        assert got.shape == want.shape, (got.shape, want.shape)
        assert jnp.allclose(got, want, atol=ATOL, rtol=RTOL), (got, want)

    # --- multi-step decode: T steps in ONE kernel call, weights stay resident ---
    T = 6
    tokens = jax.random.randint(kt, (T,), 0, V, dtype=jnp.int32)
    logp_all, h_fin, attn_all = jax.block_until_ready(
        attn_decoder_decode(tokens, hidden, encoder_outputs, kparams))

    h_ref = hidden
    logp_list, attn_list = [], []
    for t in range(T):
        lp, h_ref, aw = reference_forward(tokens[t], h_ref, encoder_outputs, params)
        logp_list.append(lp)
        attn_list.append(aw)
    logp_ref = jnp.concatenate(logp_list, axis=0)
    attn_ref = jnp.concatenate(attn_list, axis=0)

    assert logp_all.shape == logp_ref.shape, (logp_all.shape, logp_ref.shape)
    assert attn_all.shape == attn_ref.shape, (attn_all.shape, attn_ref.shape)
    assert jnp.allclose(logp_all, logp_ref, atol=ATOL, rtol=RTOL)
    assert jnp.allclose(attn_all, attn_ref, atol=ATOL, rtol=RTOL)
    assert jnp.allclose(h_fin, h_ref, atol=ATOL, rtol=RTOL)

    print("KERNEL_OK")
</pallas_src>

<mosaic_0001>
module attributes {stable_mosaic.version = 11 : i64} {
  func.func @attn_decoder_kernel(%arg0: memref<1xi32, #tpu.memory_space<smem>>, %arg1: memref<16x32xf32, #tpu.memory_space<vmem>>, %arg2: memref<1x32xf32, #tpu.memory_space<vmem>>, %arg3: memref<10x32xf32, #tpu.memory_space<vmem>>, %arg4: memref<64x10xf32, #tpu.memory_space<vmem>>, %arg5: memref<64x32xf32, #tpu.memory_space<vmem>>, %arg6: memref<32x96xf32, #tpu.memory_space<vmem>>, %arg7: memref<32x96xf32, #tpu.memory_space<vmem>>, %arg8: memref<32x16xf32, #tpu.memory_space<vmem>>, %arg9: memref<2x96xf32, #tpu.memory_space<vmem>>, %arg10: memref<3x32xf32, #tpu.memory_space<vmem>>, %arg11: memref<1x16xf32, #tpu.memory_space<vmem>>, %arg12: memref<1x32xf32, #tpu.memory_space<vmem>>, %arg13: memref<1x10xf32, #tpu.memory_space<vmem>>) attributes {dimension_semantics = [], scalar_prefetch = 0 : i64, scratch_operands = 0 : i64, tpu.core_type = #tpu.core_type<tc>} {
    %c0 = arith.constant 0 : index
    %c0_0 = arith.constant 0 : index
    %0 = vector.load %arg2[%c0, %c0_0] : memref<1x32xf32, #tpu.memory_space<vmem>>, vector<1x32xf32>
    %c0_i32 = arith.constant 0 : i32
    %1 = arith.index_cast %c0_i32 : i32 to index
    %2 = memref.load %arg0[%1] : memref<1xi32, #tpu.memory_space<smem>>
    %c0_i32_1 = arith.constant 0 : i32
    %c15_i32 = arith.constant 15 : i32
    %3 = arith.maxsi %c0_i32_1, %2 : i32
    %4 = arith.minsi %c15_i32, %3 : i32
    %5 = arith.index_cast %4 : i32 to index
    %c0_2 = arith.constant 0 : index
    %6 = vector.load %arg1[%5, %c0_2] : memref<16x32xf32, #tpu.memory_space<vmem>>, vector<1x32xf32>
    %c0_3 = arith.constant 0 : index
    %c0_4 = arith.constant 0 : index
    %7 = vector.load %arg4[%c0_3, %c0_4] : memref<64x10xf32, #tpu.memory_space<vmem>>, vector<32x10xf32>
    %cst = arith.constant dense<0.000000e+00> : vector<1x10xf32>
    %8 = tpu.matmul %6, %7, %cst {dimension_numbers = #tpu.dot_dimension_numbers<[1], [0], [0], [1], [0, 0, 1, 1], [], []>} : vector<1x32xf32>, vector<32x10xf32>, vector<1x10xf32> -> vector<1x10xf32>
    %c32 = arith.constant 32 : index
    %c0_5 = arith.constant 0 : index
    %9 = vector.load %arg4[%c32, %c0_5] : memref<64x10xf32, #tpu.memory_space<vmem>>, vector<32x10xf32>
    %cst_6 = arith.constant dense<0.000000e+00> : vector<1x10xf32>
    %10 = tpu.matmul %0, %9, %cst_6 {dimension_numbers = #tpu.dot_dimension_numbers<[1], [0], [0], [1], [0, 0, 1, 1], [], []>} : vector<1x32xf32>, vector<32x10xf32>, vector<1x10xf32> -> vector<1x10xf32>
    %11 = arith.addf %8, %10 : vector<1x10xf32>
    %c0_7 = arith.constant 0 : index
    %c0_8 = arith.constant 0 : index
    %12 = vector.load %arg10[%c0_7, %c0_8] : memref<3x32xf32, #tpu.memory_space<vmem>>, vector<1x10xf32>
    %13 = arith.addf %11, %12 : vector<1x10xf32>
    %cst_9 = arith.constant dense<0xFF800000> : vector<1xf32>
    %14 = vector.multi_reduction <maximumf>, %13, %cst_9 [1] : vector<1x10xf32> to vector<1xf32>
    %15 = vector.shape_cast %14 : vector<1xf32> to vector<1x1xf32>
    %16 = vector.broadcast %15 : vector<1x1xf32> to vector<1x10xf32>
    %17 = arith.subf %13, %16 : vector<1x10xf32>
    %18 = math.exp %17 : vector<1x10xf32>
    %cst_10 = arith.constant dense<0.000000e+00> : vector<1xf32>
    %19 = vector.multi_reduction <add>, %18, %cst_10 [1] : vector<1x10xf32> to vector<1xf32>
    %20 = vector.shape_cast %19 : vector<1xf32> to vector<1x1xf32>
    %21 = tpu.reciprocal %20 {approx = true} : vector<1x1xf32> -> vector<1x1xf32>
    %22 = vector.broadcast %21 : vector<1x1xf32> to vector<1x10xf32>
    %23 = arith.mulf %18, %22 : vector<1x10xf32>
    %24 = arith.index_cast %c0_i32 : i32 to index
    %c0_11 = arith.constant 0 : index
    %25 = vector.load %arg13[%24, %c0_11] : memref<1x10xf32, #tpu.memory_space<vmem>>, vector<1x10xf32>
    tpu.vector_store %arg13[%24, %c0_11], %23 {strides = array<i32>} : memref<1x10xf32, #tpu.memory_space<vmem>>, vector<1x10xf32>,
    %c0_12 = arith.constant 0 : index
    %c0_13 = arith.constant 0 : index
    %26 = vector.load %arg3[%c0_12, %c0_13] : memref<10x32xf32, #tpu.memory_space<vmem>>, vector<10x32xf32>
    %cst_14 = arith.constant dense<0.000000e+00> : vector<1x32xf32>
    %27 = tpu.matmul %23, %26, %cst_14 {dimension_numbers = #tpu.dot_dimension_numbers<[1], [0], [0], [1], [0, 0, 1, 1], [], []>} : vector<1x10xf32>, vector<10x32xf32>, vector<1x32xf32> -> vector<1x32xf32>
    %c0_15 = arith.constant 0 : index
    %c0_16 = arith.constant 0 : index
    %28 = vector.load %arg5[%c0_15, %c0_16] : memref<64x32xf32, #tpu.memory_space<vmem>>, vector<32x32xf32>
    %cst_17 = arith.constant dense<0.000000e+00> : vector<1x32xf32>
    %29 = tpu.matmul %6, %28, %cst_17 {dimension_numbers = #tpu.dot_dimension_numbers<[1], [0], [0], [1], [0, 0, 1, 1], [], []>} : vector<1x32xf32>, vector<32x32xf32>, vector<1x32xf32> -> vector<1x32xf32>
    %c32_18 = arith.constant 32 : index
    %c0_19 = arith.constant 0 : index
    %30 = vector.load %arg5[%c32_18, %c0_19] : memref<64x32xf32, #tpu.memory_space<vmem>>, vector<32x32xf32>
    %cst_20 = arith.constant dense<0.000000e+00> : vector<1x32xf32>
    %31 = tpu.matmul %27, %30, %cst_20 {dimension_numbers = #tpu.dot_dimension_numbers<[1], [0], [0], [1], [0, 0, 1, 1], [], []>} : vector<1x32xf32>, vector<32x32xf32>, vector<1x32xf32> -> vector<1x32xf32>
    %32 = arith.addf %29, %31 : vector<1x32xf32>
    %c1 = arith.constant 1 : index
    %c0_21 = arith.constant 0 : index
    %33 = vector.load %arg10[%c1, %c0_21] : memref<3x32xf32, #tpu.memory_space<vmem>>, vector<1x32xf32>
    %34 = arith.addf %32, %33 : vector<1x32xf32>
    %cst_22 = arith.constant 0.000000e+00 : f32
    %35 = vector.broadcast %cst_22 : f32 to vector<1x32xf32>
    %36 = arith.maximumf %34, %35 : vector<1x32xf32>
    %c0_23 = arith.constant 0 : index
    %c0_24 = arith.constant 0 : index
    %37 = vector.load %arg6[%c0_23, %c0_24] : memref<32x96xf32, #tpu.memory_space<vmem>>, vector<32x96xf32>
    %cst_25 = arith.constant dense<0.000000e+00> : vector<1x96xf32>
    %38 = tpu.matmul %36, %37, %cst_25 {dimension_numbers = #tpu.dot_dimension_numbers<[1], [0], [0], [1], [0, 0, 1, 1], [], []>} : vector<1x32xf32>, vector<32x96xf32>, vector<1x96xf32> -> vector<1x96xf32>
    %c0_26 = arith.constant 0 : index
    %c0_27 = arith.constant 0 : index
    %39 = vector.load %arg9[%c0_26, %c0_27] : memref<2x96xf32, #tpu.memory_space<vmem>>, vector<1x96xf32>
    %40 = arith.addf %38, %39 : vector<1x96xf32>
    %c0_28 = arith.constant 0 : index
    %c0_29 = arith.constant 0 : index
    %41 = vector.load %arg7[%c0_28, %c0_29] : memref<32x96xf32, #tpu.memory_space<vmem>>, vector<32x96xf32>
    %cst_30 = arith.constant dense<0.000000e+00> : vector<1x96xf32>
    %42 = tpu.matmul %0, %41, %cst_30 {dimension_numbers = #tpu.dot_dimension_numbers<[1], [0], [0], [1], [0, 0, 1, 1], [], []>} : vector<1x32xf32>, vector<32x96xf32>, vector<1x96xf32> -> vector<1x96xf32>
    %c1_31 = arith.constant 1 : index
    %c0_32 = arith.constant 0 : index
    %43 = vector.load %arg9[%c1_31, %c0_32] : memref<2x96xf32, #tpu.memory_space<vmem>>, vector<1x96xf32>
    %44 = arith.addf %42, %43 : vector<1x96xf32>
    %45 = vector.extract_strided_slice %40 {offsets = [0, 0], sizes = [1, 32], strides = [1, 1]} : vector<1x96xf32> to vector<1x32xf32>
    %46 = vector.extract_strided_slice %44 {offsets = [0, 0], sizes = [1, 32], strides = [1, 1]} : vector<1x96xf32> to vector<1x32xf32>
    %47 = arith.addf %45, %46 : vector<1x32xf32>
    %48 = arith.negf %47 : vector<1x32xf32>
    %49 = math.exp %48 : vector<1x32xf32>
    %cst_33 = arith.constant 1.000000e+00 : f32
    %50 = vector.broadcast %cst_33 : f32 to vector<1x32xf32>
    %51 = arith.addf %50, %49 : vector<1x32xf32>
    %52 = arith.divf %50, %51 : vector<1x32xf32>
    %53 = vector.extract_strided_slice %40 {offsets = [0, 32], sizes = [1, 32], strides = [1, 1]} : vector<1x96xf32> to vector<1x32xf32>
    %54 = vector.extract_strided_slice %44 {offsets = [0, 32], sizes = [1, 32], strides = [1, 1]} : vector<1x96xf32> to vector<1x32xf32>
    %55 = arith.addf %53, %54 : vector<1x32xf32>
    %56 = arith.negf %55 : vector<1x32xf32>
    %57 = math.exp %56 : vector<1x32xf32>
    %cst_34 = arith.constant 1.000000e+00 : f32
    %58 = vector.broadcast %cst_34 : f32 to vector<1x32xf32>
    %59 = arith.addf %58, %57 : vector<1x32xf32>
    %60 = arith.divf %58, %59 : vector<1x32xf32>
    %61 = vector.extract_strided_slice %40 {offsets = [0, 64], sizes = [1, 32], strides = [1, 1]} : vector<1x96xf32> to vector<1x32xf32>
    %62 = vector.extract_strided_slice %44 {offsets = [0, 64], sizes = [1, 32], strides = [1, 1]} : vector<1x96xf32> to vector<1x32xf32>
    %63 = arith.mulf %52, %62 : vector<1x32xf32>
    %64 = arith.addf %61, %63 : vector<1x32xf32>
    %65 = math.tanh %64 : vector<1x32xf32>
    %cst_35 = arith.constant 1.000000e+00 : f32
    %66 = vector.broadcast %cst_35 : f32 to vector<1x32xf32>
    %67 = arith.subf %66, %60 : vector<1x32xf32>
    %68 = arith.mulf %67, %65 : vector<1x32xf32>
    %69 = arith.mulf %60, %0 : vector<1x32xf32>
    %70 = arith.addf %68, %69 : vector<1x32xf32>
    %c0_36 = arith.constant 0 : index
    %c0_37 = arith.constant 0 : index
    %71 = vector.load %arg8[%c0_36, %c0_37] : memref<32x16xf32, #tpu.memory_space<vmem>>, vector<32x16xf32>
    %cst_38 = arith.constant dense<0.000000e+00> : vector<1x16xf32>
    %72 = tpu.matmul %70, %71, %cst_38 {dimension_numbers = #tpu.dot_dimension_numbers<[1], [0], [0], [1], [0, 0, 1, 1], [], []>} : vector<1x32xf32>, vector<32x16xf32>, vector<1x16xf32> -> vector<1x16xf32>
    %c2 = arith.constant 2 : index
    %c0_39 = arith.constant 0 : index
    %73 = vector.load %arg10[%c2, %c0_39] : memref<3x32xf32, #tpu.memory_space<vmem>>, vector<1x16xf32>
    %74 = arith.addf %72, %73 : vector<1x16xf32>
    %cst_40 = arith.constant dense<0xFF800000> : vector<1xf32>
    %75 = vector.multi_reduction <maximumf>, %74, %cst_40 [1] : vector<1x16xf32> to vector<1xf32>
    %76 = vector.shape_cast %75 : vector<1xf32> to vector<1x1xf32>
    %77 = vector.broadcast %76 : vector<1x1xf32> to vector<1x16xf32>
    %78 = arith.subf %74, %77 : vector<1x16xf32>
    %79 = math.exp %78 : vector<1x16xf32>
    %cst_41 = arith.constant dense<0.000000e+00> : vector<1xf32>
    %80 = vector.multi_reduction <add>, %79, %cst_41 [1] : vector<1x16xf32> to vector<1xf32>
    %81 = vector.shape_cast %80 : vector<1xf32> to vector<1x1xf32>
    %82 = math.log %81 : vector<1x1xf32>
    %83 = vector.broadcast %82 : vector<1x1xf32> to vector<1x16xf32>
    %84 = arith.subf %78, %83 : vector<1x16xf32>
    %85 = arith.index_cast %c0_i32 : i32 to index
    %c0_42 = arith.constant 0 : index
    %86 = vector.load %arg11[%85, %c0_42] : memref<1x16xf32, #tpu.memory_space<vmem>>, vector<1x16xf32>
    tpu.vector_store %arg11[%85, %c0_42], %84 {strides = array<i32>} : memref<1x16xf32, #tpu.memory_space<vmem>>, vector<1x16xf32>,
    %c1_i32 = arith.constant 1 : i32
    %c0_43 = arith.constant 0 : index
    %c0_44 = arith.constant 0 : index
    %87 = vector.load %arg12[%c0_43, %c0_44] : memref<1x32xf32, #tpu.memory_space<vmem>>, vector<1x32xf32>
    tpu.vector_store %arg12[%c0_43, %c0_44], %70 {strides = array<i32>} : memref<1x32xf32, #tpu.memory_space<vmem>>, vector<1x32xf32>,
    return
  }
}

</mosaic_0001>

<llo_original>
// kernel: tpu_custom_call.1
$region0: #{tpu_custom_call.1}
  #allocation0 [shape = 'u32[]', space=smem, size = 0x4, offset = 0x4, fixed_abs, tag = 'smem constant byte address 0x4 - core index']
  #allocation1 [shape = 'u32[72,128]{1,0:T(1,128)}', space=vmem, size = 0x9000, scoped, tag = 'internal scratch']
  #allocation2 [shape = 's32[1]{0:T(128)S(6)}', space=smem, size = 0x200, scoped, tag = 'scoped memory for tpu_custom_call.1']
  %s0 = inlined_call_operand.<no memory space> [shape: s32[1], index: 0, kind: input, shape index: {}]
  %s1 = inlined_call_operand.vmem [shape: f32[16,32], index: 1, kind: input, shape index: {}]
  %s2 = inlined_call_operand.vmem [shape: f32[1,32], index: 2, kind: input, shape index: {}]
  %s3 = inlined_call_operand.vmem [shape: f32[10,32], index: 3, kind: input, shape index: {}]
  %s4 = inlined_call_operand.vmem [shape: f32[64,10], index: 4, kind: input, shape index: {}]
  %s5 = inlined_call_operand.vmem [shape: f32[64,32], index: 5, kind: input, shape index: {}]
  %s6 = inlined_call_operand.vmem [shape: f32[32,96], index: 6, kind: input, shape index: {}]
  %s7 = inlined_call_operand.vmem [shape: f32[32,96], index: 7, kind: input, shape index: {}]
  %s8 = inlined_call_operand.vmem [shape: f32[32,16], index: 8, kind: input, shape index: {}]
  %s9 = inlined_call_operand.vmem [shape: f32[2,96], index: 9, kind: input, shape index: {}]
  %s10 = inlined_call_operand.vmem [shape: f32[3,32], index: 10, kind: input, shape index: {}]
  %s11 = inlined_call_operand.hbm [shape: f32[1,16], index: 11, kind: output, shape index: {0}]
  %s12 = inlined_call_operand.hbm [shape: f32[1,32], index: 12, kind: output, shape index: {1}]
  %s13 = inlined_call_operand.hbm [shape: f32[1,10], index: 13, kind: output, shape index: {2}]
  %14 = xla_tuple %s11, %s12, %s13
  %s15 = sld [smem:[#allocation0]]
  $region70: #{tpu_custom_call.1} parent=0
    _
  %s17 = ssub.s32 1, %s15
  %s18 = scalar_select 0, %s17, %s15
  %19 = sst [smem:[#allocation2]] %s0
  $region1: #{tpu_custom_call.1} parent=0
    #allocation3 [shape = 'u8[512]{0}', space=vmem, size = 0x400, scoped, tag = 'output window, operand 0, single buffered']
    #allocation4 [shape = 's32[1]{0}', space=sflag, size = 0x4, scoped, tag = 'scoped memory for tpu_custom_call.1']
    #allocation5 [shape = 'u8[512]{0}', space=vmem, size = 0x400, scoped, tag = 'output window, operand 1, single buffered']
    #allocation6 [shape = 's32[1]{0}', space=sflag, size = 0x4, scoped, tag = 'scoped memory for tpu_custom_call.1']
    #allocation7 [shape = 'u8[512]{0}', space=vmem, size = 0x400, scoped, tag = 'output window, operand 2, single buffered']
    %20 = vsyncpa [#allocation4], 0
    %21 = vsyncpa [#allocation6], 0
    // Predicated region
    $region2: #{tpu_custom_call.1} parent=1 // pred_check
      _
    $region3: #{tpu_custom_call.1} parent=1 // pred_check_branch
      %23 = sbr.rel (0) target = $region5
    $region4: #{tpu_custom_call.1} parent=1 // pred_region
      _
    $region5: #{tpu_custom_call.1} parent=1 // pred_fallthru
      _
    // Predicated region
    $region6: #{tpu_custom_call.1} parent=1 // pred_check
      _
    $region7: #{tpu_custom_call.1} parent=1 // pred_check_branch
      %25 = sbr.rel (0) target = $region9
    $region8: #{tpu_custom_call.1} parent=1 // pred_region
      _
    $region9: #{tpu_custom_call.1} parent=1 // pred_fallthru
      _
    // Predicated region
    $region10: #{tpu_custom_call.1} parent=1 // pred_check
      _
    $region11: #{tpu_custom_call.1} parent=1 // pred_check_branch
      %27 = sbr.rel (0) target = $region13
    $region12: #{tpu_custom_call.1} parent=1 // pred_region
      _
    $region13: #{tpu_custom_call.1} parent=1 // pred_fallthru
      _
    // Predicated region
    $region14: #{tpu_custom_call.1} parent=1 // pred_check
      _
    $region15: #{tpu_custom_call.1} parent=1 // pred_check_branch
      %29 = sbr.rel (0) target = $region17
    $region16: #{tpu_custom_call.1} parent=1 // pred_region
      _
    $region17: #{tpu_custom_call.1} parent=1 // pred_fallthru
      _
    // Predicated region
    $region18: #{tpu_custom_call.1} parent=1 // pred_check
      _
    $region19: #{tpu_custom_call.1} parent=1 // pred_check_branch
      %31 = sbr.rel (0) target = $region21
    $region20: #{tpu_custom_call.1} parent=1 // pred_region
      _
    $region21: #{tpu_custom_call.1} parent=1 // pred_fallthru
      _
    // Predicated region
    $region22: #{tpu_custom_call.1} parent=1 // pred_check
      _
    $region23: #{tpu_custom_call.1} parent=1 // pred_check_branch
      %33 = sbr.rel (0) target = $region25
    $region24: #{tpu_custom_call.1} parent=1 // pred_region
      _
    $region25: #{tpu_custom_call.1} parent=1 // pred_fallthru
      _
    // Predicated region
    $region26: #{tpu_custom_call.1} parent=1 // pred_check
      _
    $region27: #{tpu_custom_call.1} parent=1 // pred_check_branch
      %35 = sbr.rel (0) target = $region29
    $region28: #{tpu_custom_call.1} parent=1 // pred_region
      _
    $region29: #{tpu_custom_call.1} parent=1 // pred_fallthru
      _
    // Predicated region
    $region30: #{tpu_custom_call.1} parent=1 // pred_check
      _
    $region31: #{tpu_custom_call.1} parent=1 // pred_check_branch
      %37 = sbr.rel (0) target = $region33
    $region32: #{tpu_custom_call.1} parent=1 // pred_region
      _
    $region33: #{tpu_custom_call.1} parent=1 // pred_fallthru
      _
    // Predicated region
    $region34: #{tpu_custom_call.1} parent=1 // pred_check
      _
    $region35: #{tpu_custom_call.1} parent=1 // pred_check_branch
      %39 = sbr.rel (0) target = $region37
    $region36: #{tpu_custom_call.1} parent=1 // pred_region
      _
    $region37: #{tpu_custom_call.1} parent=1 // pred_fallthru
      _
    // Predicated region
    $region38: #{tpu_custom_call.1} parent=1 // pred_check
      _
    $region39: #{tpu_custom_call.1} parent=1 // pred_check_branch
      %41 = sbr.rel (0) target = $region41
    $region40: #{tpu_custom_call.1} parent=1 // pred_region
      _
    $region41: #{tpu_custom_call.1} parent=1 // pred_fallthru
      _
    // Predicated region
    $region42: #{tpu_custom_call.1} parent=1 // pred_check
      _
    $region43: #{tpu_custom_call.1} parent=1 // pred_check_branch
      %43 = sbr.rel (0) target = $region45
    $region44: #{tpu_custom_call.1} parent=1 // pred_region
      _
    $region45: #{tpu_custom_call.1} parent=1 // pred_fallthru
      _
    %v44 = vld [vmem:[%s2] sm:$0x1]
    %s45 = sld [smem:[#allocation2]]
    %p46 = scmp.gt.s32.totalorder %s45, 0
    %s47 = scalar_select %p46, %s45, 0
    %p48 = scmp.lt.s32.totalorder %s47, 15
    %s49 = scalar_select %p48, %s47, 15
    %s50 = scalar_lea.vmem %s1, %s49
    %v51 = vld [vmem:[%s50] sm:$0x1]
    %v52 = vld [vmem:[%s4] sm:$0xff]
    %v53 = vld [vmem:[%s4 + $0x8] sm:$0xff]
    %v54 = vld [vmem:[%s4 + $0x10] sm:$0xff]
    %v55 = vld [vmem:[%s4 + $0x18] sm:$0xff]
    %v56 = vld [vmem:[%s4 + $0x20] sm:$0xff]
    %v57 = vld [vmem:[%s4 + $0x28] sm:$0xff]
    %v58 = vld [vmem:[%s4 + $0x30] sm:$0xff]
    %v59 = vld [vmem:[%s4 + $0x38] sm:$0xff]
    %vm60 = vcmask 261120
    %v62 = vsel %vm60, %v44, 0
    %64 = vmatpush.msra.mxu0 0.0
    %65 = vmatpush.msra.mxu0 0.0
    %66 = vmatpush.msra.mxu0 0.0
    %67 = vmatpush.msra.mxu0 0.0
    %68 = vmatpush.msra.mxu0 0.0
    %69 = vmatpush.msra.mxu0 0.0
    %70 = vmatpush.msra.mxu0 0.0
    %71 = vmatpush.msra.mxu0 0.0
    %72 = vmatpush.msra.mxu0 0.0
    %73 = vmatpush.msra.mxu0 0.0
    %74 = vmatpush.msra.mxu0 0.0
    %75 = vmatpush.msra.mxu0 0.0
    %76 = vmatpush.msra.mxu0 %v59
    %77 = vmatpush.msra.mxu0 %v58
    %78 = vmatpush.msra.mxu0 %v57
    %79 = vmatpush.msra.mxu0 %v56
    %80 = vmatmul.f32.gmra.mxu0 %v62
    %v81 = vpop.f32.mrf.mxu0
    %v82 = vadd.f32 0.0, %v81
    %83 = vdwg.mxu0
    %v85 = vsel %vm60, %v51, 0
    %87 = vmatpush.msra.mxu0 0.0
    %88 = vmatpush.msra.mxu0 0.0
    %89 = vmatpush.msra.mxu0 0.0
    %90 = vmatpush.msra.mxu0 0.0
    %91 = vmatpush.msra.mxu0 0.0
    %92 = vmatpush.msra.mxu0 0.0
    %93 = vmatpush.msra.mxu0 0.0
    %94 = vmatpush.msra.mxu0 0.0
    %95 = vmatpush.msra.mxu0 0.0
    %96 = vmatpush.msra.mxu0 0.0
    %97 = vmatpush.msra.mxu0 0.0
    %98 = vmatpush.msra.mxu0 0.0
    %99 = vmatpush.msra.mxu0 %v55
    %100 = vmatpush.msra.mxu0 %v54
    %101 = vmatpush.msra.mxu0 %v53
    %102 = vmatpush.msra.mxu0 %v52
    %103 = vmatmul.f32.gmra.mxu0 %v85
    %v104 = vpop.f32.mrf.mxu0
    %v105 = vadd.f32 %v82, %v104
    %106 = vdwg.mxu0
    %v107 = vld [vmem:[%s10] sm:$0x1]
    %v108 = vadd.f32 %v105, %v107
    %vm109 = vcmask 73728
    %v110 = vsel %vm109, %v108, -inf
    %111 = vmax.xlane.f32.xlu0 %v110
    %v112 = vpop.xlane.xlu0 %111
    %v113 = vsub.f32 %v108, %v112
    %v114 = vmul.f32 %v113, 1.442695
    %v115 = vpow.pop %v114
    %v116 = vsel %vm109, %v115, 0.0
    %117 = vadd.xlane.f32.xlu0 %v116
    %v118 = vpop.xlane.xlu0 %117
    %v119 = vrcp.pop %v118
    %v120 = vmul.f32 %v115, %v119
    %121 = vst.msk [vmem:[#allocation7] sm:$0x1] %vm109, %v120
    %v122 = vld [vmem:[%s3] sm:$0xff]
    %v123 = vld [vmem:[%s3 + $0x8] sm:$0x3]
    %vm124 = vcmask 80896
    %v126 = vsel %vm124, %v120, 0
    %vm128 = vcmask 1041408
    %v130 = vsel %vm128, %v123, 0
    %132 = vmatpush.msra.mxu0 0.0
    %133 = vmatpush.msra.mxu0 0.0
    %134 = vmatpush.msra.mxu0 0.0
    %135 = vmatpush.msra.mxu0 0.0
    %136 = vmatpush.msra.mxu0 0.0
    %137 = vmatpush.msra.mxu0 0.0
    %138 = vmatpush.msra.mxu0 0.0
    %139 = vmatpush.msra.mxu0 0.0
    %140 = vmatpush.msra.mxu0 0.0
    %141 = vmatpush.msra.mxu0 0.0
    %142 = vmatpush.msra.mxu0 0.0
    %143 = vmatpush.msra.mxu0 0.0
    %144 = vmatpush.msra.mxu0 0.0
    %145 = vmatpush.msra.mxu0 0.0
    %146 = vmatpush.msra.mxu0 %v130
    %147 = vmatpush.msra.mxu0 %v122
    %148 = vmatmul.f32.gmra.mxu0 %v126
    %v149 = vpop.f32.mrf.mxu0
    %v150 = vadd.f32 0.0, %v149
    %151 = vdwg.mxu0
    %v152 = vld [vmem:[%s5] sm:$0xff]
    %v153 = vld [vmem:[%s5 + $0x8] sm:$0xff]
    %v154 = vld [vmem:[%s5 + $0x10] sm:$0xff]
    %v155 = vld [vmem:[%s5 + $0x18] sm:$0xff]
    %v156 = vld [vmem:[%s5 + $0x20] sm:$0xff]
    %v157 = vld [vmem:[%s5 + $0x28] sm:$0xff]
    %v158 = vld [vmem:[%s5 + $0x30] sm:$0xff]
    %v159 = vld [vmem:[%s5 + $0x38] sm:$0xff]
    %v161 = vsel %vm60, %v150, 0
    %163 = vmatpush.msra.mxu0 0.0
    %164 = vmatpush.msra.mxu0 0.0
    %165 = vmatpush.msra.mxu0 0.0
    %166 = vmatpush.msra.mxu0 0.0
    %167 = vmatpush.msra.mxu0 0.0
    %168 = vmatpush.msra.mxu0 0.0
    %169 = vmatpush.msra.mxu0 0.0
    %170 = vmatpush.msra.mxu0 0.0
    %171 = vmatpush.msra.mxu0 0.0
    %172 = vmatpush.msra.mxu0 0.0
    %173 = vmatpush.msra.mxu0 0.0
    %174 = vmatpush.msra.mxu0 0.0
    %175 = vmatpush.msra.mxu0 %v159
    %176 = vmatpush.msra.mxu0 %v158
    %177 = vmatpush.msra.mxu0 %v157
    %178 = vmatpush.msra.mxu0 %v156
    %179 = vmatmul.f32.gmra.mxu0 %v161
    %v180 = vpop.f32.mrf.mxu0
    %v181 = vadd.f32 0.0, %v180
    %182 = vdwg.mxu0
    %183 = vmatpush.msra.mxu0 0.0
    %184 = vmatpush.msra.mxu0 0.0
    %185 = vmatpush.msra.mxu0 0.0
    %186 = vmatpush.msra.mxu0 0.0
    %187 = vmatpush.msra.mxu0 0.0
    %188 = vmatpush.msra.mxu0 0.0
    %189 = vmatpush.msra.mxu0 0.0
    %190 = vmatpush.msra.mxu0 0.0
    %191 = vmatpush.msra.mxu0 0.0
    %192 = vmatpush.msra.mxu0 0.0
    %193 = vmatpush.msra.mxu0 0.0
    %194 = vmatpush.msra.mxu0 0.0
    %195 = vmatpush.msra.mxu0 %v155
    %196 = vmatpush.msra.mxu0 %v154
    %197 = vmatpush.msra.mxu0 %v153
    %198 = vmatpush.msra.mxu0 %v152
    %199 = vmatmul.f32.gmra.mxu0 %v85
    %v200 = vpop.f32.mrf.mxu0
    %v201 = vadd.f32 %v181, %v200
    %202 = vdwg.mxu0
    %v203 = vld [vmem:[%s10 + $0x1] sm:$0x1]
    %v204 = vadd.f32 %v201, %v203
    %v205 = vmax.f32 %v204, 0.0
    %v206 = vld [vmem:[%s6] sm:$0xff]
    %v207 = vld [vmem:[%s6 + $0x8] sm:$0xff]
    %v208 = vld [vmem:[%s6 + $0x10] sm:$0xff]
    %v209 = vld [vmem:[%s6 + $0x18] sm:$0xff]
    %v210 = vld [vmem:[%s9] sm:$0x1]
    %v212 = vsel %vm60, %v205, 0
    %214 = vmatpush.msra.mxu0 0.0
    %215 = vmatpush.msra.mxu0 0.0
    %216 = vmatpush.msra.mxu0 0.0
    %217 = vmatpush.msra.mxu0 0.0
    %218 = vmatpush.msra.mxu0 0.0
    %219 = vmatpush.msra.mxu0 0.0
    %220 = vmatpush.msra.mxu0 0.0
    %221 = vmatpush.msra.mxu0 0.0
    %222 = vmatpush.msra.mxu0 0.0
    %223 = vmatpush.msra.mxu0 0.0
    %224 = vmatpush.msra.mxu0 0.0
    %225 = vmatpush.msra.mxu0 0.0
    %226 = vmatpush.msra.mxu0 %v209
    %227 = vmatpush.msra.mxu0 %v208
    %228 = vmatpush.msra.mxu0 %v207
    %229 = vmatpush.msra.mxu0 %v206
    %230 = vmatmul.f32.gmra.mxu0 %v212
    %v231 = vpop.f32.mrf.mxu0
    %v232 = vadd.f32 %v210, %v231
    %233 = vdwg.mxu0
    %v234 = vld [vmem:[%s7] sm:$0xff]
    %v235 = vld [vmem:[%s7 + $0x8] sm:$0xff]
    %v236 = vld [vmem:[%s7 + $0x10] sm:$0xff]
    %v237 = vld [vmem:[%s7 + $0x18] sm:$0xff]
    %v238 = vld [vmem:[%s9 + $0x1] sm:$0x1]
    %239 = vmatpush.msra.mxu0 0.0
    %240 = vmatpush.msra.mxu0 0.0
    %241 = vmatpush.msra.mxu0 0.0
    %242 = vmatpush.msra.mxu0 0.0
    %243 = vmatpush.msra.mxu0 0.0
    %244 = vmatpush.msra.mxu0 0.0
    %245 = vmatpush.msra.mxu0 0.0
    %246 = vmatpush.msra.mxu0 0.0
    %247 = vmatpush.msra.mxu0 0.0
    %248 = vmatpush.msra.mxu0 0.0
    %249 = vmatpush.msra.mxu0 0.0
    %250 = vmatpush.msra.mxu0 0.0
    %251 = vmatpush.msra.mxu0 %v237
    %252 = vmatpush.msra.mxu0 %v236
    %253 = vmatpush.msra.mxu0 %v235
    %254 = vmatpush.msra.mxu0 %v234
    %255 = vmatmul.f32.gmra.mxu0 %v62
    %v256 = vpop.f32.mrf.mxu0
    %v257 = vadd.f32 %v238, %v256
    %258 = vdwg.mxu0
    %v259 = vadd.f32 %v232, %v257
    %v260 = vxor.u32 %v259, 2147483648
    %v261 = vmul.f32 %v260, 1.442695
    %v262 = vpow.pop %v261
    %v263 = vadd.f32 %v262, 1.0
    %v264 = vrcp.pop %v263
    %v265 = vmul.f32 %v263, %v264
    %v266 = vsub.f32 1.0, %v265
    %v267 = vmul.f32 %v264, %v266
    %v268 = vadd.f32 %v264, %v267
    %vm269 = vweird.f32 %v263
    %vm270 = vweird.f32 %v264
    %vm271 = vmor %vm269, %vm270
    %v272 = vsel %vm271, %v264, %v268
    %v273 = vand.u32 2147483647, %v263
    %vm274 = vcmp.eq.f32.partialorder %v273, 8.507059e+37
    %v275 = vand.u32 %v263, 2147483648
    %v276 = vor.u32 1.1754944e-38, %v275
    %v277 = vsel %vm274, %v276, %v272
    %v278 = vmul.f32 1.0, %v277
    %280 = vrot.lane.b32.xlu0 %v257, 64
    %v281 = vpop.permute.xlu0 %280
    %v283 = vmul.f32 %v278, %v281
    %285 = vrot.lane.b32.xlu0 %v283, 64
    %v286 = vpop.permute.xlu0 %285
    %v288 = vadd.f32 %v232, %v286
    %v289 = vtanh.pop %v288
    %v290 = vsub.f32 1.0, %v278
    %292 = vrot.lane.b32.xlu0 %v289, 96
    %v293 = vpop.permute.xlu0 %292
    %v295 = vmul.f32 %v290, %v293
    %v296 = vperm.slane %v44, 0
    %297 = vrot.lane.b32.xlu0 %v296, 32
    %v298 = vpop.permute.xlu0 %297
    %v300 = vmul.f32 %v278, %v298
    %v301 = vadd.f32 %v295, %v300
    %v302 = vld [vmem:[%s8] sm:$0xff]
    %v303 = vld [vmem:[%s8 + $0x8] sm:$0xff]
    %v304 = vld [vmem:[%s8 + $0x10] sm:$0xff]
    %v305 = vld [vmem:[%s8 + $0x18] sm:$0xff]
    %v306 = vld [vmem:[%s10 + $0x2] sm:$0x1]
    %308 = vrot.lane.b32.xlu0 %v301, 96
    %v309 = vpop.permute.xlu0 %308
    %v310 = vsel %vm60, %v309, 0
    %312 = vmatpush.msra.mxu0 0.0
    %313 = vmatpush.msra.mxu0 0.0
    %314 = vmatpush.msra.mxu0 0.0
    %315 = vmatpush.msra.mxu0 0.0
    %316 = vmatpush.msra.mxu0 0.0
    %317 = vmatpush.msra.mxu0 0.0
    %318 = vmatpush.msra.mxu0 0.0
    %319 = vmatpush.msra.mxu0 0.0
    %320 = vmatpush.msra.mxu0 0.0
    %321 = vmatpush.msra.mxu0 0.0
    %322 = vmatpush.msra.mxu0 0.0
    %323 = vmatpush.msra.mxu0 0.0
    %324 = vmatpush.msra.mxu0 %v305
    %325 = vmatpush.msra.mxu0 %v304
    %326 = vmatpush.msra.mxu0 %v303
    %327 = vmatpush.msra.mxu0 %v302
    %328 = vmatmul.f32.gmra.mxu0 %v310
    %v329 = vpop.f32.mrf.mxu0
    %v330 = vadd.f32 %v306, %v329
    %331 = vdwg.mxu0
    %vm332 = vcmask 122880
    %v333 = vsel %vm332, %v330, -inf
    %334 = vmax.xlane.f32.xlu0 %v333
    %v335 = vpop.xlane.xlu0 %334
    %v336 = vsub.f32 %v330, %v335
    %v337 = vmul.f32 %v336, 1.442695
    %v338 = vpow.pop %v337
    %v339 = vsel %vm332, %v338, 0.0
    %340 = vadd.xlane.f32.xlu0 %v339
    %v341 = vpop.xlane.xlu0 %340
    %v342 = vlog2.pop %v341
    %v343 = vmul.f32 %v342, 0.6931472
    %v344 = vsub.f32 %v336, %v343
    %345 = vst.msk [vmem:[#allocation3] sm:$0x1] %vm332, %v344
    %vm347 = vcmask 253952
    %348 = vst.msk [vmem:[#allocation5] sm:$0x1] %vm347, %v309
    // Predicated region
    $region46: #{tpu_custom_call.1} parent=1 // pred_check
      _
    $region47: #{tpu_custom_call.1} parent=1 // pred_check_branch
      %350 = sbr.rel (0) target = $region49
    $region48: #{tpu_custom_call.1} parent=1 // pred_region
      %352 = vsyncadd [#allocation4], 0
      %s354 = sshll.u32 [#allocation3], 4
      %s355 = int_to_ptr.vmem [resolvable:$true] %s354
      %s356 = sshll.u32 %s11, 4
      %s357 = int_to_ptr.hbm [resolvable:$true] %s356
      %359 = dma.vmem_to_hbm [thread:$0]  %s355, 16, %s357, [#allocation4]
    $region49: #{tpu_custom_call.1} parent=1 // pred_fallthru
      _
    // Predicated region
    $region50: #{tpu_custom_call.1} parent=1 // pred_check
      _
    $region51: #{tpu_custom_call.1} parent=1 // pred_check_branch
      %361 = sbr.rel (0) target = $region53
    $region52: #{tpu_custom_call.1} parent=1 // pred_region
      %363 = vsyncadd [#allocation6], 0
      %s365 = sshll.u32 [#allocation5], 4
      %s366 = int_to_ptr.vmem [resolvable:$true] %s365
      %s367 = sshll.u32 %s12, 4
      %s368 = int_to_ptr.hbm [resolvable:$true] %s367
      %370 = dma.vmem_to_hbm [thread:$0]  %s366, 16, %s368, [#allocation6]
    $region53: #{tpu_custom_call.1} parent=1 // pred_fallthru
      _
    // Predicated region
    $region54: #{tpu_custom_call.1} parent=1 // pred_check
      _
    $region55: #{tpu_custom_call.1} parent=1 // pred_check_branch
      %372 = sbr.rel (0) target = $region57
    $region56: #{tpu_custom_call.1} parent=1 // pred_region
      %374 = vsyncadd [#allocation6], 0
      %s376 = sshll.u32 [#allocation7], 4
      %s377 = int_to_ptr.vmem [resolvable:$true] %s376
      %s378 = sshll.u32 %s13, 4
      %s379 = int_to_ptr.hbm [resolvable:$true] %s378
      %381 = dma.vmem_to_hbm [thread:$0]  %s377, 16, %s379, [#allocation6]
    $region57: #{tpu_custom_call.1} parent=1 // pred_fallthru
      _
    // Predicated region
    $region58: #{tpu_custom_call.1} parent=1 // pred_check
      _
    $region59: #{tpu_custom_call.1} parent=1 // pred_check_branch
      %383 = sbr.rel (0) target = $region61
    $region60: #{tpu_custom_call.1} parent=1 // pred_region
      %385 = dma.done [#allocation4], 16
    $region61: #{tpu_custom_call.1} parent=1 // pred_fallthru
      _
    // Predicated region
    $region62: #{tpu_custom_call.1} parent=1 // pred_check
      _
    $region63: #{tpu_custom_call.1} parent=1 // pred_check_branch
      %387 = sbr.rel (0) target = $region65
    $region64: #{tpu_custom_call.1} parent=1 // pred_region
      %389 = dma.done [#allocation6], 16
    $region65: #{tpu_custom_call.1} parent=1 // pred_fallthru
      _
    // Predicated region
    $region66: #{tpu_custom_call.1} parent=1 // pred_check
      _
    $region67: #{tpu_custom_call.1} parent=1 // pred_check_branch
      %391 = sbr.rel (0) target = $region69
    $region68: #{tpu_custom_call.1} parent=1 // pred_region
      %393 = dma.done [#allocation6], 16
    $region69: #{tpu_custom_call.1} parent=1 // pred_fallthru
      _
    %394 = vsyncpa [#allocation4], 1
    %395 = vsyncpa [#allocation6], 1

</llo_original>
